<compile_context>
chip_gen: v7x
topology: tpu7x:2x2x1
jax: 0.10.0
libtpu: 0.0.40
codegen_flags: <defaults>
</compile_context>

<pallas_src>
import functools
from math import ceil

import jax
import jax.numpy as jnp
from jax import lax
from jax.experimental import pallas as pl
from jax.experimental.pallas import tpu as pltpu


def _round_up(x, m):
    return ((x + m - 1) // m) * m


def _resblock_kernel(xm_ref, xh_ref, wg_ref, bg_ref, wo_ref, bo_ref,
                     out_ref, skip_ref, *, kernel_size, dilation, pad,
                     compute_dtype):
    """One (batch, L-tile) grid step.  Channels on sublanes, L on lanes.

    xm_ref  : (1, C, Lt)    main input tile (padded input, window start t*Lt)
    xh_ref  : (1, C, HALO)  lane-aligned halo immediately right of the tile
    wg_ref  : (2C, K*C)     fused tanh|sigmoid conv weight, tap-major columns
                            (sigmoid rows pre-scaled by 0.5 for the tanh trick)
    bg_ref  : (2C, 1)       fused gate bias (sigmoid half pre-scaled by 0.5)
    wo_ref  : (C+Cs, C)     fused res|skip 1x1 conv weight (res rows first)
    bo_ref  : (C+Cs, 1)
    out_ref : (1, C,  Lt)
    skip_ref: (1, Cs, Lt)
    """
    K, dil = kernel_size, dilation
    C = wo_ref.shape[1]
    Lt = out_ref.shape[-1]

    xm = xm_ref[0]                                     # (C, Lt)   input dtype
    xh = xh_ref[0]                                     # (C, HALO) input dtype

    # Stitch main tile + halo once in the matmul dtype, then stack the K
    # lane-shifted tap windows on the contraction axis: the whole gated conv
    # becomes ONE deep MXU matmul (depth K*C) instead of K shallow ones.
    x_ext = jnp.concatenate([xm.astype(compute_dtype),
                             xh.astype(compute_dtype)], axis=-1)   # (C, Lt+HALO)
    taps = jnp.concatenate(
        [x_ext[:, k * dil:k * dil + Lt] for k in range(K)], axis=0)  # (K*C, Lt)

    pre = jnp.dot(wg_ref[...], taps,
                  preferred_element_type=jnp.float32) + bg_ref[...]  # (2C, Lt)

    # Gating with a single EUP pass: sigmoid(x) = 0.5*(1 + tanh(x/2)), and the
    # 1/2 factor was already folded into the sigmoid half of w_gate / b_gate.
    th = jnp.tanh(pre)                                               # (2C, Lt)
    g = th[:C, :] * (0.5 * th[C:, :] + 0.5)                          # (C, Lt)

    # Fused 1x1 convs: rows [:C] = residual conv, rows [C:] = skip conv.
    rs = jnp.dot(wo_ref[...], g.astype(compute_dtype),
                 preferred_element_type=jnp.float32) + bo_ref[...]   # (C+Cs, Lt)

    # Residual add reuses the already-resident input tile (offset by the left
    # "same" padding) — the input is read from HBM exactly once per tile.
    if pad == 0:
        xres = xm
    else:
        xres = jnp.concatenate([xm[:, pad:], xh[:, :pad]], axis=-1)  # (C, Lt)
    out_ref[0] = (rs[:C, :] + xres.astype(jnp.float32)).astype(out_ref.dtype)
    skip_ref[0] = rs[C:, :].astype(skip_ref.dtype)


def residual_block_forward(x_ncl, params, *, kernel_size=3, dilation=1,
                           block_l=2048):
    """x_ncl: (B, C_res, L) in PyTorch NCW layout.  Returns (output, skip), NCW.

    block_l: L-tile size (multiple of 128).  Default 2048 fits v7x's 64 MiB
    VMEM with headroom; v5e/v6e (128 MiB) can pass 4096-8192.
    """
    assert block_l > 0 and block_l % 128 == 0
    B, C, L = x_ncl.shape
    K, dil = kernel_size, dilation
    pad = ceil((1 - 1 + dil * (K - 1)) / 2)        # Conv1dSamePadding padding
    ext = dil * (K - 1)                            # halo columns really needed
    halo = max(128, _round_up(max(ext, 1), 128))   # lane-aligned halo block

    w_gate, b_gate = params["w_gate"], params["b_gate"]
    w_out, b_out = params["w_out"], params["b_out"]
    compute_dtype = w_gate.dtype
    Cs = w_out.shape[0] - C

    # Lane-tile size (multiple of 128).  With a single sample make sure there
    # are >= 2 tiles so both of v7x's TensorCores get work.
    Lt = min(block_l, _round_up(L, 128))
    if B == 1 and Lt >= L and L > 128:
        Lt = _round_up(-(-L // 2), 128)
    assert Lt % 128 == 0
    assert Lt % halo == 0, "L tile must be a multiple of the halo block"
    T = pl.cdiv(L, Lt)
    L_round = T * Lt
    halo_blocks = Lt // halo

    # Single cheap glue op: zero-pad left by the "same" amount and right so
    # every main tile plus its aligned halo block is in bounds.  No gather, no
    # transpose, no duplicated activation copy in HBM.
    x_pad = jnp.pad(x_ncl, ((0, 0), (0, 0), (pad, L_round + halo - pad - L)))

    out, skip = pl.pallas_call(
        functools.partial(_resblock_kernel, kernel_size=K, dilation=dil,
                          pad=pad, compute_dtype=compute_dtype),
        grid=(B, T),
        in_specs=[
            # Two windows of the SAME padded array: main tile + right halo
            # (both streamed / double-buffered by the Pallas pipeline).
            pl.BlockSpec((1, C, Lt), lambda b, t: (b, 0, t)),
            pl.BlockSpec((1, C, halo), lambda b, t: (b, 0, (t + 1) * halo_blocks)),
            # Fused weights/biases: constant index_map -> resident in VMEM.
            pl.BlockSpec((2 * C, K * C), lambda b, t: (0, 0)),
            pl.BlockSpec((2 * C, 1), lambda b, t: (0, 0)),
            pl.BlockSpec((C + Cs, C), lambda b, t: (0, 0)),
            pl.BlockSpec((C + Cs, 1), lambda b, t: (0, 0)),
        ],
        out_specs=(
            pl.BlockSpec((1, C, Lt), lambda b, t: (b, 0, t)),
            pl.BlockSpec((1, Cs, Lt), lambda b, t: (b, 0, t)),
        ),
        out_shape=(
            jax.ShapeDtypeStruct((B, C, L_round), x_ncl.dtype),
            jax.ShapeDtypeStruct((B, Cs, L_round), x_ncl.dtype),
        ),
        compiler_params=pltpu.CompilerParams(
            dimension_semantics=("parallel", "parallel"),
            vmem_limit_bytes=48 * 1024 * 1024,
        ),
    )(x_pad, x_pad, w_gate, b_gate, w_out, b_out)

    # Outputs are already NCW; just drop the tile-rounding columns.
    return out[:, :, :L], skip[:, :, :L]


def init_params(key, n_residual, n_skip, kernel_size=3):
    """Deterministic synthetic weights in PyTorch Conv1d layout (Co, Ci, K)."""
    C, Cs, K = n_residual, n_skip, kernel_size
    ks = jax.random.split(key, 8)
    s = 0.3
    return dict(
        wt=s * jax.random.normal(ks[0], (C, C, K), jnp.float32),
        ws=s * jax.random.normal(ks[1], (C, C, K), jnp.float32),
        wskip=s * jax.random.normal(ks[2], (Cs, C, 1), jnp.float32),
        wres=s * jax.random.normal(ks[3], (C, C, 1), jnp.float32),
        bt=s * jax.random.normal(ks[4], (C,), jnp.float32),
        bs=s * jax.random.normal(ks[5], (C,), jnp.float32),
        bskip=s * jax.random.normal(ks[6], (Cs,), jnp.float32),
        bres=s * jax.random.normal(ks[7], (C,), jnp.float32),
    )


def prepare_params(w, compute_dtype=jnp.bfloat16):
    """PyTorch Conv1d weights -> fused, MXU-friendly kernel params.

    w_gate: (2C, K*C), column block k holds tap k; rows [:C] tanh, rows [C:]
    sigmoid.  The sigmoid half (weights AND bias) is pre-scaled by 0.5 so the
    kernel evaluates sigmoid(x) = 0.5*(1 + tanh(x/2)) with a single tanh.
    Biases stay f32 (added after the f32-accumulated matmuls).
    """
    wt, ws = w["wt"], w["ws"]                            # (C, C, K)
    C, _, K = wt.shape
    stacked = jnp.concatenate([wt, 0.5 * ws], axis=0)    # (2C, C, K)
    w_gate = jnp.transpose(stacked, (0, 2, 1)).reshape(2 * C, K * C)
    b_gate = jnp.concatenate([w["bt"], 0.5 * w["bs"]])[:, None]        # (2C, 1)
    w_out = jnp.concatenate([w["wres"][:, :, 0], w["wskip"][:, :, 0]], axis=0)
    b_out = jnp.concatenate([w["bres"], w["bskip"]])[:, None]          # (C+Cs, 1)
    return {"w_gate": w_gate.astype(compute_dtype),
            "b_gate": b_gate.astype(jnp.float32),
            "w_out": w_out.astype(compute_dtype),
            "b_out": b_out.astype(jnp.float32)}


def _reference(x_ncl, w, *, kernel_size=3, dilation=1):
    """Pure-JAX reference with exact PyTorch Conv1dSamePadding semantics (NCW)."""
    pad = ceil((1 - 1 + dilation * (kernel_size - 1)) / 2)
    dn = ("NCH", "OIH", "NCH")

    def conv(x, wgt, b, p, dil):
        y = lax.conv_general_dilated(x, wgt, window_strides=(1,),
                                     padding=[(p, p)], rhs_dilation=(dil,),
                                     dimension_numbers=dn)
        return y + b[None, :, None]

    L = x_ncl.shape[-1]
    t = jnp.tanh(conv(x_ncl, w["wt"], w["bt"], pad, dilation)[:, :, :L])
    s = jax.nn.sigmoid(conv(x_ncl, w["ws"], w["bs"], pad, dilation)[:, :, :L])
    g = t * s
    skip = conv(g, w["wskip"], w["bskip"], 0, dilation)
    res = conv(g, w["wres"], w["bres"], 0, dilation)
    return res + x_ncl, skip


if __name__ == "__main__":
    key = jax.random.PRNGKey(0)

    def check(x, pt_w, *, kernel_size, dilation, block_l, dtype, atol, rtol):
        params = prepare_params(pt_w, compute_dtype=dtype)
        out, skip = residual_block_forward(x, params, kernel_size=kernel_size,
                                           dilation=dilation, block_l=block_l)
        out, skip = jax.block_until_ready(out), jax.block_until_ready(skip)
        ref_out, ref_skip = _reference(x, pt_w, kernel_size=kernel_size,
                                       dilation=dilation)
        assert out.shape == ref_out.shape and skip.shape == ref_skip.shape
        assert jnp.allclose(out, ref_out, atol=atol, rtol=rtol), \
            float(jnp.abs(out - ref_out).max())
        assert jnp.allclose(skip, ref_skip, atol=atol, rtol=rtol), \
            float(jnp.abs(skip - ref_skip).max())

    # --- Test 1: toy shapes (single L-tile), K=3, dilation=1 -----------------
    B, C_res, C_skip, L = 2, 4, 8, 16
    kx, kp, key = jax.random.split(key, 3)
    x = jax.random.normal(kx, (B, C_res, L), jnp.float32)      # NCW like PyTorch
    pt_w = init_params(kp, C_res, C_skip, kernel_size=3)
    # f32 MXU path: exact-tolerance validation against the reference.
    check(x, pt_w, kernel_size=3, dilation=1, block_l=2048,
          dtype=jnp.float32, atol=1e-5, rtol=1e-5)
    # bf16 MXU path (production default): looser tolerance.
    check(x, pt_w, kernel_size=3, dilation=1, block_l=2048,
          dtype=jnp.bfloat16, atol=5e-2, rtol=5e-2)

    # --- Test 2: multi-tile grid (T=3), dilation=2, L not a tile multiple ----
    B2, C2, Cs2, L2 = 2, 8, 4, 300
    kx2, kp2, key = jax.random.split(key, 3)
    x2 = jax.random.normal(kx2, (B2, C2, L2), jnp.float32)
    pt_w2 = init_params(kp2, C2, Cs2, kernel_size=3)
    check(x2, pt_w2, kernel_size=3, dilation=2, block_l=128,
          dtype=jnp.float32, atol=1e-5, rtol=1e-5)

    # --- Test 3: even kernel_size (cut-last-element path) and B=1 (forced
    #     2-tile split so both v7x TensorCores would get work) ---------------
    B3, C3, Cs3, L3 = 1, 8, 8, 384
    kx3, kp3, key = jax.random.split(key, 3)
    x3 = jax.random.normal(kx3, (B3, C3, L3), jnp.float32)
    pt_w3 = init_params(kp3, C3, Cs3, kernel_size=2)
    check(x3, pt_w3, kernel_size=2, dilation=1, block_l=2048,
          dtype=jnp.float32, atol=1e-5, rtol=1e-5)

    print("KERNEL_OK")
</pallas_src>

<mosaic_0001>
module attributes {stable_mosaic.version = 11 : i64} {
  func.func @_resblock_kernel(%arg0: i32, %arg1: i32, %arg2: memref<1x4x128xf32, #tpu.memory_space<vmem>>, %arg3: memref<1x4x128xf32, #tpu.memory_space<vmem>>, %arg4: memref<8x12xf32, #tpu.memory_space<vmem>>, %arg5: memref<8x1xf32, #tpu.memory_space<vmem>>, %arg6: memref<12x4xf32, #tpu.memory_space<vmem>>, %arg7: memref<12x1xf32, #tpu.memory_space<vmem>>, %arg8: memref<1x4x128xf32, #tpu.memory_space<vmem>>, %arg9: memref<1x8x128xf32, #tpu.memory_space<vmem>>) attributes {dimension_semantics = [#tpu.dimension_semantics<parallel>, #tpu.dimension_semantics<parallel>], iteration_bounds = array<i64: 2, 1>, scalar_prefetch = 0 : i64, scratch_operands = 0 : i64, tpu.core_type = #tpu.core_type<tc>, window_params = [{transform_indices = @transform_0, window_bounds = array<i64: 1, 4, 128>}, {transform_indices = @transform_1, window_bounds = array<i64: 1, 4, 128>}, {pipeline_mode = #tpu.pipeline_mode<synchronous>, transform_indices = @transform_2, window_bounds = array<i64: 8, 12>}, {pipeline_mode = #tpu.pipeline_mode<synchronous>, transform_indices = @transform_3, window_bounds = array<i64: 8, 1>}, {pipeline_mode = #tpu.pipeline_mode<synchronous>, transform_indices = @transform_4, window_bounds = array<i64: 12, 4>}, {pipeline_mode = #tpu.pipeline_mode<synchronous>, transform_indices = @transform_5, window_bounds = array<i64: 12, 1>}, {transform_indices = @transform_6, window_bounds = array<i64: 1, 4, 128>}, {transform_indices = @transform_7, window_bounds = array<i64: 1, 8, 128>}]} {
    %c0 = arith.constant 0 : index
    %c0_0 = arith.constant 0 : index
    %c0_1 = arith.constant 0 : index
    %0 = vector.load %arg2[%c0, %c0_0, %c0_1] : memref<1x4x128xf32, #tpu.memory_space<vmem>>, vector<1x4x128xf32>
    %1 = vector.shape_cast %0 : vector<1x4x128xf32> to vector<4x128xf32>
    %c0_2 = arith.constant 0 : index
    %c0_3 = arith.constant 0 : index
    %c0_4 = arith.constant 0 : index
    %2 = vector.load %arg3[%c0_2, %c0_3, %c0_4] : memref<1x4x128xf32, #tpu.memory_space<vmem>>, vector<1x4x128xf32>
    %3 = vector.shape_cast %2 : vector<1x4x128xf32> to vector<4x128xf32>
    %4 = tpu.concatenate %1, %3 in 1 : vector<4x128xf32>, vector<4x128xf32> -> vector<4x256xf32>
    %5 = vector.extract_strided_slice %4 {offsets = [0, 0], sizes = [4, 128], strides = [1, 1]} : vector<4x256xf32> to vector<4x128xf32>
    %6 = vector.extract_strided_slice %4 {offsets = [0, 1], sizes = [4, 128], strides = [1, 1]} : vector<4x256xf32> to vector<4x128xf32>
    %7 = vector.extract_strided_slice %4 {offsets = [0, 2], sizes = [4, 128], strides = [1, 1]} : vector<4x256xf32> to vector<4x128xf32>
    %8 = tpu.concatenate %5, %6, %7 in 0 : vector<4x128xf32>, vector<4x128xf32>, vector<4x128xf32> -> vector<12x128xf32>
    %c0_5 = arith.constant 0 : index
    %c0_6 = arith.constant 0 : index
    %9 = vector.load %arg4[%c0_5, %c0_6] : memref<8x12xf32, #tpu.memory_space<vmem>>, vector<8x12xf32>
    %cst = arith.constant dense<0.000000e+00> : vector<8x128xf32>
    %10 = tpu.matmul %9, %8, %cst {dimension_numbers = #tpu.dot_dimension_numbers<[1], [0], [0], [1], [0, 0, 1, 1], [], []>} : vector<8x12xf32>, vector<12x128xf32>, vector<8x128xf32> -> vector<8x128xf32>
    %c0_7 = arith.constant 0 : index
    %c0_8 = arith.constant 0 : index
    %11 = vector.load %arg5[%c0_7, %c0_8] : memref<8x1xf32, #tpu.memory_space<vmem>>, vector<8x1xf32>
    %12 = vector.broadcast %11 : vector<8x1xf32> to vector<8x128xf32>
    %13 = arith.addf %10, %12 : vector<8x128xf32>
    %14 = math.tanh %13 : vector<8x128xf32>
    %15 = vector.extract_strided_slice %14 {offsets = [0, 0], sizes = [4, 128], strides = [1, 1]} : vector<8x128xf32> to vector<4x128xf32>
    %16 = vector.extract_strided_slice %14 {offsets = [4, 0], sizes = [4, 128], strides = [1, 1]} : vector<8x128xf32> to vector<4x128xf32>
    %cst_9 = arith.constant 5.000000e-01 : f32
    %17 = vector.broadcast %cst_9 : f32 to vector<4x128xf32>
    %18 = arith.mulf %17, %16 : vector<4x128xf32>
    %cst_10 = arith.constant 5.000000e-01 : f32
    %19 = vector.broadcast %cst_10 : f32 to vector<4x128xf32>
    %20 = arith.addf %18, %19 : vector<4x128xf32>
    %21 = arith.mulf %15, %20 : vector<4x128xf32>
    %c0_11 = arith.constant 0 : index
    %c0_12 = arith.constant 0 : index
    %22 = vector.load %arg6[%c0_11, %c0_12] : memref<12x4xf32, #tpu.memory_space<vmem>>, vector<12x4xf32>
    %cst_13 = arith.constant dense<0.000000e+00> : vector<12x128xf32>
    %23 = tpu.matmul %22, %21, %cst_13 {dimension_numbers = #tpu.dot_dimension_numbers<[1], [0], [0], [1], [0, 0, 1, 1], [], []>} : vector<12x4xf32>, vector<4x128xf32>, vector<12x128xf32> -> vector<12x128xf32>
    %c0_14 = arith.constant 0 : index
    %c0_15 = arith.constant 0 : index
    %24 = vector.load %arg7[%c0_14, %c0_15] : memref<12x1xf32, #tpu.memory_space<vmem>>, vector<12x1xf32>
    %25 = vector.broadcast %24 : vector<12x1xf32> to vector<12x128xf32>
    %26 = arith.addf %23, %25 : vector<12x128xf32>
    %27 = vector.extract_strided_slice %1 {offsets = [0, 1], sizes = [4, 127], strides = [1, 1]} : vector<4x128xf32> to vector<4x127xf32>
    %28 = vector.extract_strided_slice %3 {offsets = [0, 0], sizes = [4, 1], strides = [1, 1]} : vector<4x128xf32> to vector<4x1xf32>
    %29 = tpu.concatenate %27, %28 in 1 : vector<4x127xf32>, vector<4x1xf32> -> vector<4x128xf32>
    %30 = vector.extract_strided_slice %26 {offsets = [0, 0], sizes = [4, 128], strides = [1, 1]} : vector<12x128xf32> to vector<4x128xf32>
    %31 = arith.addf %30, %29 : vector<4x128xf32>
    %c0_16 = arith.constant 0 : index
    %c0_17 = arith.constant 0 : index
    %c0_18 = arith.constant 0 : index
    %32 = vector.load %arg8[%c0_16, %c0_17, %c0_18] : memref<1x4x128xf32, #tpu.memory_space<vmem>>, vector<1x4x128xf32>
    %33 = vector.shape_cast %32 : vector<1x4x128xf32> to vector<4x128xf32>
    %34 = vector.shape_cast %31 : vector<4x128xf32> to vector<1x4x128xf32>
    tpu.vector_store %arg8[%c0_16, %c0_17, %c0_18], %34 {strides = array<i32>} : memref<1x4x128xf32, #tpu.memory_space<vmem>>, vector<1x4x128xf32>,
    %35 = vector.extract_strided_slice %26 {offsets = [4, 0], sizes = [8, 128], strides = [1, 1]} : vector<12x128xf32> to vector<8x128xf32>
    %c0_19 = arith.constant 0 : index
    %c0_20 = arith.constant 0 : index
    %c0_21 = arith.constant 0 : index
    %36 = vector.load %arg9[%c0_19, %c0_20, %c0_21] : memref<1x8x128xf32, #tpu.memory_space<vmem>>, vector<1x8x128xf32>
    %37 = vector.shape_cast %36 : vector<1x8x128xf32> to vector<8x128xf32>
    %38 = vector.shape_cast %35 : vector<8x128xf32> to vector<1x8x128xf32>
    tpu.vector_store %arg9[%c0_19, %c0_20, %c0_21], %38 {strides = array<i32>} : memref<1x8x128xf32, #tpu.memory_space<vmem>>, vector<1x8x128xf32>,
    return
  }
  func.func @transform_0(%arg0: i32, %arg1: i32) -> (i32, i32, i32) {
    %c0_i32 = arith.constant 0 : i32
    %c0_i32_0 = arith.constant 0 : i32
    return %arg0, %c0_i32, %arg1 : i32, i32, i32
  }
  func.func @transform_1(%arg0: i32, %arg1: i32) -> (i32, i32, i32) {
    %c1_i32 = arith.constant 1 : i32
    %0 = arith.addi %arg1, %c1_i32 : i32
    %c1_i32_0 = arith.constant 1 : i32
    %1 = arith.muli %0, %c1_i32_0 : i32
    %c0_i32 = arith.constant 0 : i32
    %c0_i32_1 = arith.constant 0 : i32
    return %arg0, %c0_i32, %1 : i32, i32, i32
  }
  func.func @transform_2(%arg0: i32, %arg1: i32) -> (i32, i32) {
    %c0_i32 = arith.constant 0 : i32
    %c0_i32_0 = arith.constant 0 : i32
    %c0_i32_1 = arith.constant 0 : i32
    return %c0_i32, %c0_i32_0 : i32, i32
  }
  func.func @transform_3(%arg0: i32, %arg1: i32) -> (i32, i32) {
    %c0_i32 = arith.constant 0 : i32
    %c0_i32_0 = arith.constant 0 : i32
    %c0_i32_1 = arith.constant 0 : i32
    return %c0_i32, %c0_i32_0 : i32, i32
  }
  func.func @transform_4(%arg0: i32, %arg1: i32) -> (i32, i32) {
    %c0_i32 = arith.constant 0 : i32
    %c0_i32_0 = arith.constant 0 : i32
    %c0_i32_1 = arith.constant 0 : i32
    return %c0_i32, %c0_i32_0 : i32, i32
  }
  func.func @transform_5(%arg0: i32, %arg1: i32) -> (i32, i32) {
    %c0_i32 = arith.constant 0 : i32
    %c0_i32_0 = arith.constant 0 : i32
    %c0_i32_1 = arith.constant 0 : i32
    return %c0_i32, %c0_i32_0 : i32, i32
  }
  func.func @transform_6(%arg0: i32, %arg1: i32) -> (i32, i32, i32) {
    %c0_i32 = arith.constant 0 : i32
    %c0_i32_0 = arith.constant 0 : i32
    return %arg0, %c0_i32, %arg1 : i32, i32, i32
  }
  func.func @transform_7(%arg0: i32, %arg1: i32) -> (i32, i32, i32) {
    %c0_i32 = arith.constant 0 : i32
    %c0_i32_0 = arith.constant 0 : i32
    return %arg0, %c0_i32, %arg1 : i32, i32, i32
  }
}

</mosaic_0001>

<llo_original>
// kernel: tpu_custom_call.1
$region0: #{tpu_custom_call.1}
  #allocation0 [shape = 'u32[]', space=smem, size = 0x4, offset = 0x4, fixed_abs, tag = 'smem constant byte address 0x4 - core index']
  #allocation1 [shape = 'u32[144,128]{1,0:T(1,128)}', space=vmem, size = 0x12000, scoped, tag = 'internal scratch']
  %s0 = inlined_call_operand.vmem [shape: f32[2,4,256], index: 0, kind: input, shape index: {}]
  %s1 = inlined_call_operand.vmem [shape: f32[2,4,256], index: 1, kind: input, shape index: {}]
  %s2 = inlined_call_operand.vmem [shape: f32[8,12], index: 2, kind: input, shape index: {}]
  %s3 = inlined_call_operand.vmem [shape: f32[8,1], index: 3, kind: input, shape index: {}]
  %s4 = inlined_call_operand.vmem [shape: f32[12,4], index: 4, kind: input, shape index: {}]
  %s5 = inlined_call_operand.vmem [shape: f32[12,1], index: 5, kind: input, shape index: {}]
  %s6 = inlined_call_operand.hbm [shape: f32[2,4,128], index: 6, kind: output, shape index: {0}]
  %s7 = inlined_call_operand.hbm [shape: f32[2,8,128], index: 7, kind: output, shape index: {1}]
  %8 = xla_tuple %s6, %s7
  %s9 = sld [smem:[#allocation0]]
  $region65: #{tpu_custom_call.1} parent=0
    _
  %s11 = ssub.s32 1, %s9
  %s12 = scalar_select 0, %s11, %s9
  $region1: #{tpu_custom_call.1} parent=0
    #allocation2 [shape = 'u8[4096]{0}', space=vmem, size = 0x1000, scoped, tag = 'output window, operand 0']
    #allocation3 [shape = 's32[2]{0}', space=sflag, size = 0x8, scoped, tag = 'scoped memory for tpu_custom_call.1']
    #allocation4 [shape = 'u8[8192]{0}', space=vmem, size = 0x2000, scoped, tag = 'output window, operand 1']
    #allocation5 [shape = 's32[2]{0}', space=sflag, size = 0x8, scoped, tag = 'scoped memory for tpu_custom_call.1']
    %13 = vsyncpa [#allocation3], 0
    %s14 = scalar_lea.sflag [#allocation3], 1
    %15 = vsyncpa %s14, 0
    %16 = vsyncpa [#allocation5], 0
    %s17 = scalar_lea.sflag [#allocation5], 1
    %18 = vsyncpa %s17, 0
    loop: start=0, step=1, limit=4
    $region2: #{tpu_custom_call.1} parent=1 // loop_pre_header
      _
    $region3: #{tpu_custom_call.1} parent=1 // loop_header
      %s20 = sphi 0, %s24
      %p21 = scmp.ge.s32.totalorder %s20, 4
      %s27 = sphi 0, %s39
      %s28 = sphi 0, %s35
      %s29 = sphi 0, %s27
      %s30 = sphi 0, %s28
      %s31 = sphi 0, %s29
      %s32 = sphi 0, %s30
      %s44 = sphi 0, %s46
      %s47 = sphi 0, %s44
      %s48 = sphi 0, %s47
      %s64 = sphi 0, %s48
      %s74 = sphi 0, %s76
      %s77 = sphi 0, %s74
      %s78 = sphi 0, %s77
      %s94 = sphi 0, %s78
      %s98 = sphi 0, %s98
      %s100 = sphi 0, %s98
      %s101 = sphi 0, %s100
      %s115 = sphi 0, %s101
      %s119 = sphi 0, %s119
      %s121 = sphi 0, %s119
      %s122 = sphi 0, %s121
      %s136 = sphi 0, %s122
      %s140 = sphi 0, %s140
      %s142 = sphi 0, %s140
      %s143 = sphi 0, %s142
      %s157 = sphi 0, %s143
      %s161 = sphi 0, %s161
      %s163 = sphi 0, %s161
      %s164 = sphi 0, %s163
      %s178 = sphi 0, %s164
      %s186 = sphi 0, %s188
      %s189 = sphi 0, %s186
      %s190 = sphi 0, %s189
      %s206 = sphi 0, %s190
      %s214 = sphi 0, %s216
      %s217 = sphi 0, %s214
      %s218 = sphi 0, %s217
      %s234 = sphi 0, %s218
    $region4: #{tpu_custom_call.1} parent=1 // loop_header_branch
      %23 = sbr.rel (%p21) target = $region8
    $region5: #{tpu_custom_call.1} parent=1 // loop_body
      %s25 = ssub.s32 %s20, 1
      %s26 = ssub.s32 %s20, 2
      %s33 = sadd.s32 1, %s28
      %p34 = scmp.ge.s32.totalorder %s33, 1
      %s35 = scalar_select %p34, 0, %s33
      %s36 = sadd.s32 1, %s27
      %s37 = scalar_select %p34, %s36, %s27
      %p38 = scmp.ge.s32.totalorder %s37, 2
      %s39 = scalar_select %p38, 0, %s37
      %s40 = ssub.s32 %s27, %s39
      %s41 = ssub.s32 %s28, %s35
      %s42 = sor.u32 %s40, %s41
      %p43 = scmp.eq.s32.totalorder %s42, 0
      %s45 = sadd.s32 %s44, 1
      %s46 = scalar_select %p43, %s44, %s45
      %p49 = pneg %p43
      %p50 = scmp.eq.s32.totalorder %s20, 1
      %p51 = por %p49, %p50
      %p52 = scmp.ne.s32.totalorder %s44, %s47
      %p53 = scmp.eq.s32.totalorder %s20, 0
      %p54 = por %p52, %p53
      %p55 = scmp.ne.s32.totalorder %s44, %s47
      %p56 = scmp.eq.s32.totalorder %s25, 1
      %p57 = por %p55, %p56
      %p58 = scmp.ne.s32.totalorder %s47, %s48
      %p59 = scmp.eq.s32.totalorder %s25, 0
      %p60 = por %p58, %p59
      %p61 = scmp.ne.s32.totalorder %s47, %s48
      %p62 = scmp.eq.s32.totalorder %s26, 1
      %p63 = por %p61, %p62
      %p65 = scmp.ne.s32.totalorder %s48, %s64
      %p66 = scmp.eq.s32.totalorder %s26, 0
      %p67 = por %p65, %p66
      %s68 = sadd.s32 %s28, 1
      %s69 = sadd.s32 %s35, 1
      %s70 = ssub.s32 %s27, %s39
      %s71 = ssub.s32 %s68, %s69
      %s72 = sor.u32 %s70, %s71
      %p73 = scmp.eq.s32.totalorder %s72, 0
      %s75 = sadd.s32 %s74, 1
      %s76 = scalar_select %p73, %s74, %s75
      %p79 = pneg %p73
      %p80 = scmp.eq.s32.totalorder %s20, 1
      %p81 = por %p79, %p80
      %p82 = scmp.ne.s32.totalorder %s74, %s77
      %p83 = scmp.eq.s32.totalorder %s20, 0
      %p84 = por %p82, %p83
      %p85 = scmp.ne.s32.totalorder %s74, %s77
      %p86 = scmp.eq.s32.totalorder %s25, 1
      %p87 = por %p85, %p86
      %p88 = scmp.ne.s32.totalorder %s77, %s78
      %p89 = scmp.eq.s32.totalorder %s25, 0
      %p90 = por %p88, %p89
      %p91 = scmp.ne.s32.totalorder %s77, %s78
      %p92 = scmp.eq.s32.totalorder %s26, 1
      %p93 = por %p91, %p92
      %p95 = scmp.ne.s32.totalorder %s78, %s94
      %p96 = scmp.eq.s32.totalorder %s26, 0
      %p97 = por %p95, %p96
      %s99 = sadd.s32 %s98, 1
      %p102 = scmp.eq.s32.totalorder %s20, 1
      %p103 = scmp.ne.s32.totalorder %s98, %s100
      %p104 = scmp.eq.s32.totalorder %s20, 0
      %p105 = por %p103, %p104
      %p106 = scmp.ne.s32.totalorder %s98, %s100
      %p107 = scmp.eq.s32.totalorder %s25, 1
      %p108 = por %p106, %p107
      %p109 = scmp.ne.s32.totalorder %s100, %s101
      %p110 = scmp.eq.s32.totalorder %s25, 0
      %p111 = por %p109, %p110
      %p112 = scmp.ne.s32.totalorder %s100, %s101
      %p113 = scmp.eq.s32.totalorder %s26, 1
      %p114 = por %p112, %p113
      %p116 = scmp.ne.s32.totalorder %s101, %s115
      %p117 = scmp.eq.s32.totalorder %s26, 0
      %p118 = por %p116, %p117
      %s120 = sadd.s32 %s119, 1
      %p123 = scmp.eq.s32.totalorder %s20, 1
      %p124 = scmp.ne.s32.totalorder %s119, %s121
      %p125 = scmp.eq.s32.totalorder %s20, 0
      %p126 = por %p124, %p125
      %p127 = scmp.ne.s32.totalorder %s119, %s121
      %p128 = scmp.eq.s32.totalorder %s25, 1
      %p129 = por %p127, %p128
      %p130 = scmp.ne.s32.totalorder %s121, %s122
      %p131 = scmp.eq.s32.totalorder %s25, 0
      %p132 = por %p130, %p131
      %p133 = scmp.ne.s32.totalorder %s121, %s122
      %p134 = scmp.eq.s32.totalorder %s26, 1
      %p135 = por %p133, %p134
      %p137 = scmp.ne.s32.totalorder %s122, %s136
      %p138 = scmp.eq.s32.totalorder %s26, 0
      %p139 = por %p137, %p138
      %s141 = sadd.s32 %s140, 1
      %p144 = scmp.eq.s32.totalorder %s20, 1
      %p145 = scmp.ne.s32.totalorder %s140, %s142
      %p146 = scmp.eq.s32.totalorder %s20, 0
      %p147 = por %p145, %p146
      %p148 = scmp.ne.s32.totalorder %s140, %s142
      %p149 = scmp.eq.s32.totalorder %s25, 1
      %p150 = por %p148, %p149
      %p151 = scmp.ne.s32.totalorder %s142, %s143
      %p152 = scmp.eq.s32.totalorder %s25, 0
      %p153 = por %p151, %p152
      %p154 = scmp.ne.s32.totalorder %s142, %s143
      %p155 = scmp.eq.s32.totalorder %s26, 1
      %p156 = por %p154, %p155
      %p158 = scmp.ne.s32.totalorder %s143, %s157
      %p159 = scmp.eq.s32.totalorder %s26, 0
      %p160 = por %p158, %p159
      %s162 = sadd.s32 %s161, 1
      %p165 = scmp.eq.s32.totalorder %s20, 1
      %p166 = scmp.ne.s32.totalorder %s161, %s163
      %p167 = scmp.eq.s32.totalorder %s20, 0
      %p168 = por %p166, %p167
      %p169 = scmp.ne.s32.totalorder %s161, %s163
      %p170 = scmp.eq.s32.totalorder %s25, 1
      %p171 = por %p169, %p170
      %p172 = scmp.ne.s32.totalorder %s163, %s164
      %p173 = scmp.eq.s32.totalorder %s25, 0
      %p174 = por %p172, %p173
      %p175 = scmp.ne.s32.totalorder %s163, %s164
      %p176 = scmp.eq.s32.totalorder %s26, 1
      %p177 = por %p175, %p176
      %p179 = scmp.ne.s32.totalorder %s164, %s178
      %p180 = scmp.eq.s32.totalorder %s26, 0
      %p181 = por %p179, %p180
      %s182 = ssub.s32 %s27, %s39
      %s183 = ssub.s32 %s28, %s35
      %s184 = sor.u32 %s182, %s183
      %p185 = scmp.eq.s32.totalorder %s184, 0
      %s187 = sadd.s32 %s186, 1
      %s188 = scalar_select %p185, %s186, %s187
      %p191 = pneg %p185
      %p192 = scmp.eq.s32.totalorder %s20, 1
      %p193 = por %p191, %p192
      %p194 = scmp.ne.s32.totalorder %s186, %s189
      %p195 = scmp.eq.s32.totalorder %s20, 0
      %p196 = por %p194, %p195
      %p197 = scmp.ne.s32.totalorder %s186, %s189
      %p198 = scmp.eq.s32.totalorder %s25, 1
      %p199 = por %p197, %p198
      %p200 = scmp.ne.s32.totalorder %s189, %s190
      %p201 = scmp.eq.s32.totalorder %s25, 0
      %p202 = por %p200, %p201
      %p203 = scmp.ne.s32.totalorder %s189, %s190
      %p204 = scmp.eq.s32.totalorder %s26, 1
      %p205 = por %p203, %p204
      %p207 = scmp.ne.s32.totalorder %s190, %s206
      %p208 = scmp.eq.s32.totalorder %s26, 0
      %p209 = por %p207, %p208
      %s210 = ssub.s32 %s27, %s39
      %s211 = ssub.s32 %s28, %s35
      %s212 = sor.u32 %s210, %s211
      %p213 = scmp.eq.s32.totalorder %s212, 0
      %s215 = sadd.s32 %s214, 1
      %s216 = scalar_select %p213, %s214, %s215
      %p219 = pneg %p213
      %p220 = scmp.eq.s32.totalorder %s20, 1
      %p221 = por %p219, %p220
      %p222 = scmp.ne.s32.totalorder %s214, %s217
      %p223 = scmp.eq.s32.totalorder %s20, 0
      %p224 = por %p222, %p223
      %p225 = scmp.ne.s32.totalorder %s214, %s217
      %p226 = scmp.eq.s32.totalorder %s25, 1
      %p227 = por %p225, %p226
      %p228 = scmp.ne.s32.totalorder %s217, %s218
      %p229 = scmp.eq.s32.totalorder %s25, 0
      %p230 = por %p228, %p229
      %p231 = scmp.ne.s32.totalorder %s217, %s218
      %p232 = scmp.eq.s32.totalorder %s26, 1
      %p233 = por %p231, %p232
      %p235 = scmp.ne.s32.totalorder %s218, %s234
      %p236 = scmp.eq.s32.totalorder %s26, 0
      %p237 = por %p235, %p236
      %p238 = scmp.le.s32.totalorder 1, %s20
      %p239 = scmp.lt.s32.totalorder %s20, 3
      %p240 = pnand %p238, %p239
      %p241 = pneg %p240
      // Predicated region
      $region9: #{tpu_custom_call.1} parent=5 // pred_check
        _
      $region10: #{tpu_custom_call.1} parent=5 // pred_check_branch
        %243 = sbr.rel (%p240) target = $region12
      $region11: #{tpu_custom_call.1} parent=5 // pred_region
        %s244 = ssub.s32 %s20, 1
        // Predicated region
        $region13: #{tpu_custom_call.1} parent=11 // pred_check
          %p245 = pneg %p111
        $region14: #{tpu_custom_call.1} parent=11 // pred_check_branch
          %247 = sbr.rel (%p245) target = $region16
        $region15: #{tpu_custom_call.1} parent=11 // pred_region
          _
        $region16: #{tpu_custom_call.1} parent=11 // pred_fallthru
          _
        // Predicated region
        $region17: #{tpu_custom_call.1} parent=11 // pred_check
          %p248 = pneg %p132
        $region18: #{tpu_custom_call.1} parent=11 // pred_check_branch
          %250 = sbr.rel (%p248) target = $region20
        $region19: #{tpu_custom_call.1} parent=11 // pred_region
          _
        $region20: #{tpu_custom_call.1} parent=11 // pred_fallthru
          _
        // Predicated region
        $region21: #{tpu_custom_call.1} parent=11 // pred_check
          %p251 = pneg %p153
        $region22: #{tpu_custom_call.1} parent=11 // pred_check_branch
          %253 = sbr.rel (%p251) target = $region24
        $region23: #{tpu_custom_call.1} parent=11 // pred_region
          _
        $region24: #{tpu_custom_call.1} parent=11 // pred_fallthru
          _
        // Predicated region
        $region25: #{tpu_custom_call.1} parent=11 // pred_check
          %p254 = pneg %p174
        $region26: #{tpu_custom_call.1} parent=11 // pred_check_branch
          %256 = sbr.rel (%p254) target = $region28
        $region27: #{tpu_custom_call.1} parent=11 // pred_region
          _
        $region28: #{tpu_custom_call.1} parent=11 // pred_fallthru
          _
      $region12: #{tpu_custom_call.1} parent=5 // pred_fallthru
        _
      %p257 = scmp.lt.s32.totalorder %s20, 2
      // Predicated region
      $region29: #{tpu_custom_call.1} parent=5 // pred_check
        %p258 = pneg %p257
      $region30: #{tpu_custom_call.1} parent=5 // pred_check_branch
        %260 = sbr.rel (%p258) target = $region32
      $region31: #{tpu_custom_call.1} parent=5 // pred_region
        // Predicated region
        $region33: #{tpu_custom_call.1} parent=31 // pred_check
          %p261 = pneg %p54
        $region34: #{tpu_custom_call.1} parent=31 // pred_check_branch
          %263 = sbr.rel (%p261) target = $region36
        $region35: #{tpu_custom_call.1} parent=31 // pred_region
          %p264 = scmp.lt.s32.totalorder %s27, 1
          %s265 = scalar_select %p264, %s27, 1
          %p266 = scmp.lt.s32.totalorder %s28, 1
          %s267 = scalar_select %p266, %s28, 1
          %s268 = smul.addr %s265, 2
          %s269 = sadd.s32 %s267, %s268
          %s270 = smul.addr %s269, 4
          %s271 = scalar_lea.vmem %s0, %s270
        $region36: #{tpu_custom_call.1} parent=31 // pred_fallthru
          _
        // Predicated region
        $region37: #{tpu_custom_call.1} parent=31 // pred_check
          %p272 = pneg %p84
        $region38: #{tpu_custom_call.1} parent=31 // pred_check_branch
          %274 = sbr.rel (%p272) target = $region40
        $region39: #{tpu_custom_call.1} parent=31 // pred_region
          %s275 = sadd.s32 %s28, 1
          %p276 = scmp.lt.s32.totalorder %s27, 1
          %s277 = scalar_select %p276, %s27, 1
          %p278 = scmp.lt.s32.totalorder %s275, 1
          %s279 = scalar_select %p278, %s275, 1
          %s280 = smul.addr %s277, 2
          %s281 = sadd.s32 %s279, %s280
          %s282 = smul.addr %s281, 4
          %s283 = scalar_lea.vmem %s1, %s282
          %s284 = sadd.s32 %s28, 1
        $region40: #{tpu_custom_call.1} parent=31 // pred_fallthru
          _
      $region32: #{tpu_custom_call.1} parent=5 // pred_fallthru
        _
      %p285 = scmp.le.s32.totalorder 1, %s20
      %p286 = scmp.lt.s32.totalorder %s20, 3
      %p287 = pnand %p285, %p286
      %p288 = pneg %p287
      // Predicated region
      $region41: #{tpu_custom_call.1} parent=5 // pred_check
        _
      $region42: #{tpu_custom_call.1} parent=5 // pred_check_branch
        %290 = sbr.rel (%p287) target = $region44
      $region43: #{tpu_custom_call.1} parent=5 // pred_region
        %s291 = ssub.s32 %s20, 1
        %p292 = scmp.lt.s32.totalorder %s29, 1
        %s293 = scalar_select %p292, %s29, 1
        %p294 = scmp.lt.s32.totalorder %s30, 1
        %s295 = scalar_select %p294, %s30, 1
        %s296 = smul.addr %s293, 2
        %s297 = sadd.s32 %s295, %s296
        %s298 = smul.addr %s297, 4
        %s299 = scalar_lea.vmem %s0, %s298
        %p300 = pneg %p60
        %p301 = pneg %p57
        %s302 = sadd.s32 %s30, 1
        %p303 = scmp.lt.s32.totalorder %s29, 1
        %s304 = scalar_select %p303, %s29, 1
        %p305 = scmp.lt.s32.totalorder %s302, 1
        %s306 = scalar_select %p305, %s302, 1
        %s307 = smul.addr %s304, 2
        %s308 = sadd.s32 %s306, %s307
        %s309 = smul.addr %s308, 4
        %s310 = scalar_lea.vmem %s1, %s309
        %p311 = pneg %p90
        %p312 = pneg %p87
        %p313 = pneg %p111
        %p314 = pneg %p108
        %p315 = pneg %p132
        %p316 = pneg %p129
        %p317 = pneg %p153
        %p318 = pneg %p150
        %p319 = pneg %p174
        %p320 = pneg %p171
        %p321 = pneg %p202
        %p322 = pneg %p199
        %s323 = sand.u32 %s189, 1
        %s324 = scalar_lea.sflag [#allocation3], %s323
        %s325 = sand.u32 %s189, 1
        %s326 = smul.addr %s325, 4
        %s327 = scalar_lea.vmem [#allocation2], %s326
        %p328 = pneg %p230
        %p329 = pneg %p227
        %s330 = sand.u32 %s217, 1
        %s331 = scalar_lea.sflag [#allocation5], %s330
        %s332 = sand.u32 %s217, 1
        %s333 = smul.addr %s332, 8
        %s334 = scalar_lea.vmem [#allocation4], %s333
        %p335 = scmp.lt.s32.totalorder %s29, 1
        %s336 = scalar_select %p335, %s29, 1
        %p337 = scmp.lt.s32.totalorder %s30, 1
        %s338 = scalar_select %p337, %s30, 1
        %s339 = smul.addr %s336, 2
        %s340 = sadd.s32 %s338, %s339
        %s341 = smul.addr %s340, 4
        %s342 = scalar_lea.vmem %s0, %s341
        %s343 = sadd.s32 %s30, 1
        %p344 = scmp.lt.s32.totalorder %s29, 1
        %s345 = scalar_select %p344, %s29, 1
        %p346 = scmp.lt.s32.totalorder %s343, 1
        %s347 = scalar_select %p346, %s343, 1
        %s348 = smul.addr %s345, 2
        %s349 = sadd.s32 %s347, %s348
        %s350 = smul.addr %s349, 4
        %s351 = scalar_lea.vmem %s1, %s350
        %s352 = sadd.s32 %s30, 1
        %v353 = vld [vmem:[%s342] sm:$0xf]
        %v354 = vld [vmem:[%s351] sm:$0xf]
        %v357 = vrot.slane %v353, 4
        %v358 = vrot.slane %v354, 4
        %359 = vrot.lane.b32.xlu0 %v357, 127
        %v360 = vpop.permute.xlu0 %359
        %361 = vrot.lane.b32.xlu0 %v358, 127
        %v362 = vpop.permute.xlu0 %361
        %vm363 = vcmask 1039360
        %v364 = vsel %vm363, %v360, %v362
        %366 = vrot.lane.b32.xlu0 %v353, 126
        %v367 = vpop.permute.xlu0 %366
        %368 = vrot.lane.b32.xlu0 %v354, 126
        %v369 = vpop.permute.xlu0 %368
        %vm370 = vcmask 1031168
        %v371 = vsel %vm370, %v367, %v369
        %vm372 = vcmask 1043456
        %v373 = vsel %vm372, %v353, %v364
        %v374 = vld [vmem:[%s2] sm:$0xff]
        %v375 = vld [vmem:[%s3] sm:$0xff]
        %377 = vset.pattern.permute.xlu0 0
        %378 = vperm.xlu0 %377, %v375
        %v379 = vpop.permute.xlu0 %378
        %vm381 = vcmask 97280
        %v383 = vsel %vm381, %v374, 0
        %v385 = vsel %vm372, %v371, 0
        %387 = vmatprep.subr.mxu0 0.0
        %388 = vmatpush1.msra.mxu0 %v373
        %389 = vmatprep.subr.mxu0 0.0
        %390 = vmatpush1.msra.mxu0 %v385
        %391 = vmatprep.subr.mxu0 0.0
        %392 = vmatpush1.msra.mxu0 0.0
        %393 = vmatprep.subr.mxu0 0.0
        %394 = vmatpush1.msra.mxu0 0.0
        %395 = vmatprep.subr.mxu0 0.0
        %396 = vmatpush1.msra.mxu0 0.0
        %397 = vmatprep.subr.mxu0 0.0
        %398 = vmatpush1.msra.mxu0 0.0
        %399 = vmatprep.subr.mxu0 0.0
        %400 = vmatpush1.msra.mxu0 0.0
        %401 = vmatprep.subr.mxu0 0.0
        %402 = vmatpush1.msra.mxu0 0.0
        %403 = vmatprep.subr.mxu0 0.0
        %404 = vmatpush1.msra.mxu0 0.0
        %405 = vmatprep.subr.mxu0 0.0
        %406 = vmatpush1.msra.mxu0 0.0
        %407 = vmatprep.subr.mxu0 0.0
        %408 = vmatpush1.msra.mxu0 0.0
        %409 = vmatprep.subr.mxu0 0.0
        %410 = vmatpush1.msra.mxu0 0.0
        %411 = vmatprep.subr.mxu0 0.0
        %412 = vmatpush1.msra.mxu0 0.0
        %413 = vmatprep.subr.mxu0 0.0
        %414 = vmatpush1.msra.mxu0 0.0
        %415 = vmatprep.subr.mxu0 0.0
        %416 = vmatpush1.msra.mxu0 0.0
        %417 = vmatprep.subr.mxu0 0.0
        %418 = vmatpush1.msra.mxu0 0.0
        %419 = vmatprep.subr.mxu0 0.0
        %420 = vmatpush1.msra.mxu0 0.0
        %421 = vmatprep.subr.mxu0 0.0
        %422 = vmatpush1.msra.mxu0 0.0
        %423 = vmatprep.subr.mxu0 0.0
        %424 = vmatpush1.msra.mxu0 0.0
        %425 = vmatprep.subr.mxu0 0.0
        %426 = vmatpush1.msra.mxu0 0.0
        %427 = vmatprep.subr.mxu0 0.0
        %428 = vmatpush1.msra.mxu0 0.0
        %429 = vmatprep.subr.mxu0 0.0
        %430 = vmatpush1.msra.mxu0 0.0
        %431 = vmatprep.subr.mxu0 0.0
        %432 = vmatpush1.msra.mxu0 0.0
        %433 = vmatprep.subr.mxu0 0.0
        %434 = vmatpush1.msra.mxu0 0.0
        %435 = vmatprep.subr.mxu0 0.0
        %436 = vmatpush1.msra.mxu0 0.0
        %437 = vmatprep.subr.mxu0 0.0
        %438 = vmatpush1.msra.mxu0 0.0
        %439 = vmatprep.subr.mxu0 0.0
        %440 = vmatpush1.msra.mxu0 0.0
        %441 = vmatprep.subr.mxu0 0.0
        %442 = vmatpush1.msra.mxu0 0.0
        %443 = vmatprep.subr.mxu0 0.0
        %444 = vmatpush1.msra.mxu0 0.0
        %445 = vmatprep.subr.mxu0 0.0
        %446 = vmatpush1.msra.mxu0 0.0
        %447 = vmatprep.subr.mxu0 0.0
        %448 = vmatpush1.msra.mxu0 0.0
        %449 = vmatprep.subr.mxu0 0.0
        %450 = vmatpush1.msra.mxu0 0.0
        %451 = vmatprep.mubr.f32.mxu0 0.0
        %452 = vmatmul.mubr.f32.gmra.mrb[0].mxu0 %v383
        %v453 = vpop.f32.mrb[0].mxu0
        %v454 = vadd.f32 %v379, %v453
        %v455 = vpop.f32.mrb[0].mxu0
        %456 = vdwg.mxu0
        %v457 = vtanh.pop %v454
        %v458 = vmul.f32 %v457, 0.5
        %v459 = vadd.f32 %v458, 0.5
        %v461 = vrot.slane %v459, 4
        %v463 = vmul.f32 %v457, %v461
        %v464 = vld [vmem:[%s4] sm:$0xff]
        %v465 = vld [vmem:[%s4 + $0x8] sm:$0xf]
        %v466 = vld [vmem:[%s5] sm:$0xff]
        %v467 = vld [vmem:[%s5 + $0x8] sm:$0xf]
        %469 = vset.pattern.permute.xlu0 0
        %470 = vperm.xlu0 %469, %v466
        %v471 = vpop.permute.xlu0 %470
        %474 = vset.pattern.permute.xlu0 0
        %475 = vperm.xlu0 %474, %v467
        %v476 = vpop.permute.xlu0 %475
        %vm478 = vcmask 31744
        %v480 = vsel %vm478, %v464, 0
        %v483 = vsel %vm478, %v465, 0
        %v486 = vsel %vm372, %v463, 0
        %488 = vmatprep.subr.mxu0 0.0
        %489 = vmatpush1.msra.mxu0 %v486
        %490 = vmatprep.subr.mxu0 0.0
        %491 = vmatpush1.msra.mxu0 0.0
        %492 = vmatprep.subr.mxu0 0.0
        %493 = vmatpush1.msra.mxu0 0.0
        %494 = vmatprep.subr.mxu0 0.0
        %495 = vmatpush1.msra.mxu0 0.0
        %496 = vmatprep.subr.mxu0 0.0
        %497 = vmatpush1.msra.mxu0 0.0
        %498 = vmatprep.subr.mxu0 0.0
        %499 = vmatpush1.msra.mxu0 0.0
        %500 = vmatprep.subr.mxu0 0.0
        %501 = vmatpush1.msra.mxu0 0.0
        %502 = vmatprep.subr.mxu0 0.0
        %503 = vmatpush1.msra.mxu0 0.0
        %504 = vmatprep.subr.mxu0 0.0
        %505 = vmatpush1.msra.mxu0 0.0
        %506 = vmatprep.subr.mxu0 0.0
        %507 = vmatpush1.msra.mxu0 0.0
        %508 = vmatprep.subr.mxu0 0.0
        %509 = vmatpush1.msra.mxu0 0.0
        %510 = vmatprep.subr.mxu0 0.0
        %511 = vmatpush1.msra.mxu0 0.0
        %512 = vmatprep.subr.mxu0 0.0
        %513 = vmatpush1.msra.mxu0 0.0
        %514 = vmatprep.subr.mxu0 0.0
        %515 = vmatpush1.msra.mxu0 0.0
        %516 = vmatprep.subr.mxu0 0.0
        %517 = vmatpush1.msra.mxu0 0.0
        %518 = vmatprep.subr.mxu0 0.0
        %519 = vmatpush1.msra.mxu0 0.0
        %520 = vmatprep.subr.mxu0 0.0
        %521 = vmatpush1.msra.mxu0 0.0
        %522 = vmatprep.subr.mxu0 0.0
        %523 = vmatpush1.msra.mxu0 0.0
        %524 = vmatprep.subr.mxu0 0.0
        %525 = vmatpush1.msra.mxu0 0.0
        %526 = vmatprep.subr.mxu0 0.0
        %527 = vmatpush1.msra.mxu0 0.0
        %528 = vmatprep.subr.mxu0 0.0
        %529 = vmatpush1.msra.mxu0 0.0
        %530 = vmatprep.subr.mxu0 0.0
        %531 = vmatpush1.msra.mxu0 0.0
        %532 = vmatprep.subr.mxu0 0.0
        %533 = vmatpush1.msra.mxu0 0.0
        %534 = vmatprep.subr.mxu0 0.0
        %535 = vmatpush1.msra.mxu0 0.0
        %536 = vmatprep.subr.mxu0 0.0
        %537 = vmatpush1.msra.mxu0 0.0
        %538 = vmatprep.subr.mxu0 0.0
        %539 = vmatpush1.msra.mxu0 0.0
        %540 = vmatprep.subr.mxu0 0.0
        %541 = vmatpush1.msra.mxu0 0.0
        %542 = vmatprep.subr.mxu0 0.0
        %543 = vmatpush1.msra.mxu0 0.0
        %544 = vmatprep.subr.mxu0 0.0
        %545 = vmatpush1.msra.mxu0 0.0
        %546 = vmatprep.subr.mxu0 0.0
        %547 = vmatpush1.msra.mxu0 0.0
        %548 = vmatprep.subr.mxu0 0.0
        %549 = vmatpush1.msra.mxu0 0.0
        %550 = vmatprep.subr.mxu0 0.0
        %551 = vmatpush1.msra.mxu0 0.0
        %552 = vmatprep.mubr.f32.mxu0 0.0
        %553 = vmatmul.mubr.f32.gmra.mrb[0].mxu0 %v480
        %v554 = vpop.f32.mrb[0].mxu0
        %v555 = vadd.f32 %v471, %v554
        %v556 = vpop.f32.mrb[0].mxu0
        %557 = vmatprep.mubr.f32.mxu0 0.0
        %558 = vmatmul.mubr.f32.gmra.mrb[0].mxu0 %v483
        %v559 = vpop.f32.mrb[0].mxu0
        %v560 = vadd.f32 %v476, %v559
        %v561 = vpop.f32.mrb[0].mxu0
        %562 = vdwg.mxu0
        %563 = vrot.lane.b32.xlu0 %v353, 127
        %v564 = vpop.permute.xlu0 %563
        %566 = vrot.lane.b32.xlu0 %v354, 127
        %v567 = vpop.permute.xlu0 %566
        %v569 = vsel %vm363, %v564, %v567
        %v570 = vadd.f32 %v555, %v569
        %571 = vst [vmem:[%s327] sm:$0xf] %v570
        %572 = vst [vmem:[%s334 - $0x4] sm:$0xf0] %v555
        %573 = vst [vmem:[%s334 + $0x4] sm:$0xf] %v560
        %s574 = sand.u32 %s189, 1
        %s575 = scalar_lea.sflag [#allocation3], %s574
        %s576 = sand.u32 %s189, 1
        %s577 = smul.addr %s576, 4
        %s578 = scalar_lea.vmem [#allocation2], %s577
        %s579 = sand.u32 %s217, 1
        %s580 = scalar_lea.sflag [#allocation5], %s579
        %s581 = sand.u32 %s217, 1
        %s582 = smul.addr %s581, 8
        %s583 = scalar_lea.vmem [#allocation4], %s582
        // Predicated region
        $region45: #{tpu_custom_call.1} parent=43 // pred_check
          %p584 = pneg %p199
        $region46: #{tpu_custom_call.1} parent=43 // pred_check_branch
          %586 = sbr.rel (%p584) target = $region48
        $region47: #{tpu_custom_call.1} parent=43 // pred_region
          %s588 = ssub.s32 64, 64
          %589 = vsyncadd %s575, %s588
          %s590 = sadd.s32 %s30, %s29
          %s591 = smul.addr %s590, 64
          %s592 = scalar_lea.hbm %s6, %s591
          %s594 = sshll.u32 %s578, 4
          %s595 = int_to_ptr.vmem [resolvable:$true] %s594
          %597 = dma.vmem_to_hbm [thread:$0]  %s595, 64, %s592, %s575
        $region48: #{tpu_custom_call.1} parent=43 // pred_fallthru
          _
        // Predicated region
        $region49: #{tpu_custom_call.1} parent=43 // pred_check
          %p598 = pneg %p227
        $region50: #{tpu_custom_call.1} parent=43 // pred_check_branch
          %600 = sbr.rel (%p598) target = $region52
        $region51: #{tpu_custom_call.1} parent=43 // pred_region
          %s602 = ssub.s32 128, 128
          %603 = vsyncadd %s580, %s602
          %s604 = sadd.s32 %s30, %s29
          %s605 = smul.addr %s604, 128
          %s606 = scalar_lea.hbm %s7, %s605
          %s608 = sshll.u32 %s583, 4
          %s609 = int_to_ptr.vmem [resolvable:$true] %s608
          %611 = dma.vmem_to_hbm [thread:$0]  %s609, 128, %s606, %s580
        $region52: #{tpu_custom_call.1} parent=43 // pred_fallthru
          _
      $region44: #{tpu_custom_call.1} parent=5 // pred_fallthru
        _
      %p612 = scmp.le.s32.totalorder 2, %s20
      // Predicated region
      $region53: #{tpu_custom_call.1} parent=5 // pred_check
        %p613 = pneg %p612
      $region54: #{tpu_custom_call.1} parent=5 // pred_check_branch
        %615 = sbr.rel (%p613) target = $region56
      $region55: #{tpu_custom_call.1} parent=5 // pred_region
        %s616 = ssub.s32 %s20, 2
        // Predicated region
        $region57: #{tpu_custom_call.1} parent=55 // pred_check
          %p617 = pneg %p205
        $region58: #{tpu_custom_call.1} parent=55 // pred_check_branch
          %619 = sbr.rel (%p617) target = $region60
        $region59: #{tpu_custom_call.1} parent=55 // pred_region
          %s620 = sand.u32 %s190, 1
          %s621 = scalar_lea.sflag [#allocation3], %s620
          %s622 = sand.u32 %s190, 1
          %s623 = smul.addr %s622, 4
          %s624 = scalar_lea.vmem [#allocation2], %s623
          %625 = dma.done %s621, 64
        $region60: #{tpu_custom_call.1} parent=55 // pred_fallthru
          _
        // Predicated region
        $region61: #{tpu_custom_call.1} parent=55 // pred_check
          %p626 = pneg %p233
        $region62: #{tpu_custom_call.1} parent=55 // pred_check_branch
          %628 = sbr.rel (%p626) target = $region64
        $region63: #{tpu_custom_call.1} parent=55 // pred_region
          %s629 = sand.u32 %s218, 1
          %s630 = scalar_lea.sflag [#allocation5], %s629
          %s631 = sand.u32 %s218, 1
          %s632 = smul.addr %s631, 8
          %s633 = scalar_lea.vmem [#allocation4], %s632
          %634 = dma.done %s630, 128
        $region64: #{tpu_custom_call.1} parent=55 // pred_fallthru
          _
      $region56: #{tpu_custom_call.1} parent=5 // pred_fallthru
        _
    $region6: #{tpu_custom_call.1} parent=1 // loop_footer
      %s24 = sadd.s32 1, %s20
    $region7: #{tpu_custom_call.1} parent=1 // loop_footer_branch
      %19 = sbr.rel target = $region3
    $region8: #{tpu_custom_call.1} parent=1 // loop_exit
      _
    %635 = vsyncpa [#allocation3], 1
    %s636 = scalar_lea.sflag [#allocation3], 1
    %637 = vsyncpa %s636, 1
    %638 = vsyncpa [#allocation5], 1
    %s639 = scalar_lea.sflag [#allocation5], 1
    %640 = vsyncpa %s639, 1

</llo_original>
